<compile_context>
chip_gen: v6e
topology: v6e:2x2x1
jax: 0.10.0
libtpu: 0.0.40
codegen_flags: <defaults>
</compile_context>

<pallas_src>
import functools

import jax
import jax.numpy as jnp
from jax import lax
from jax.experimental import pallas as pl
from jax.experimental.pallas import tpu as pltpu

_VMEM_LIMIT = 48 << 20     # leave headroom on v7x (64 MiB physical per TC)
_NEG_BIG = -1e9


def _exp_dtype():
    """bf16 exp on chips with a bf16 EUP (v6e / v7x); f32 elsewhere (v5e)."""
    try:
        kind = jax.devices()[0].device_kind.lower()
    except Exception:
        return jnp.float32
    if "v6" in kind or "v7" in kind or "tpu7" in kind:
        return jnp.bfloat16
    return jnp.float32


# ----------------------------------------------------------------------------
# Stage 1: hidden1(h) and hidden2(h^T)   (small arrays, single invocation)
# ----------------------------------------------------------------------------
def _prep_kernel(h_ref, w1_ref, b1_ref, w2a_ref, b2a_ref, w2b_ref, b2b_ref,
                 hx_ref, femb_ref):
    f32 = jnp.float32
    h_bf = h_ref[...]                                              # (N, F) bf16

    # hidden1: ReLU(h @ W1 + b1)  (Dropout == identity at inference)
    hx = jnp.dot(h_bf, w1_ref[...], preferred_element_type=f32) + b1_ref[...]
    hx_ref[...] = jnp.maximum(hx, 0.0).astype(hx_ref.dtype)        # (N, H1)

    # hidden2 applied to h^T, via contracting dims (no materialized transpose)
    f1 = lax.dot_general(h_bf, w2a_ref[...], (((0,), (0,)), ((), ())),
                         preferred_element_type=f32) + b2a_ref[...]  # (F, H1)
    f1 = jnp.maximum(f1, 0.0)
    femb = jnp.dot(f1.astype(jnp.bfloat16), w2b_ref[...],
                   preferred_element_type=f32) + b2b_ref[...]        # (F, H2)
    femb_ref[...] = femb.astype(femb_ref.dtype)


# ----------------------------------------------------------------------------
# Stage 2: one GAT layer, tiled over dst-row blocks
# ----------------------------------------------------------------------------
def _gat_layer_kernel(x_full_ref, x_tile_ref, mask_ref, w_ref, al_ref, ar_ref,
                      bias_ref, out_ref, *, num_head, head_dim, exp_dtype):
    f32 = jnp.float32
    H, D = num_head, head_dim
    HD = H * D

    x_full = x_full_ref[...]            # (N, d_in)  bf16, all src nodes
    x_tile = x_tile_ref[...]            # (tq, d_in) bf16, this tile's dst rows
    mask = mask_ref[...].astype(f32)    # (tq, N) additive mask: 0 edge / -1e9

    w = w_ref[...]                      # (d_in, HD) bf16
    # Per-head projections.  feat_src is recomputed per dst tile; its cost
    # (N*d_in*HD) is negligible next to the (tq*N*HD) attention work and it
    # keeps the grid axis safely "parallel" (no cross-tile carried state).
    feat_src = jnp.dot(x_full, w, preferred_element_type=f32)       # (N, HD)
    feat_src_bf = feat_src.astype(jnp.bfloat16)
    feat_dst = jnp.dot(x_tile, w, preferred_element_type=f32)       # (tq, HD)

    # All heads' attention terms as two MXU matmuls against the block-diagonal
    # attention matrices (packed host-side):
    #   el[h, src] = <attn_l[h], feat_src[src, h*D:(h+1)*D]>
    #   er[dst, h] = <attn_r[h], feat_dst[dst, h*D:(h+1)*D]>
    el = lax.dot_general(al_ref[...], feat_src_bf, (((1,), (1,)), ((), ())),
                         preferred_element_type=f32)                # (H, N)
    er = lax.dot_general(feat_dst.astype(jnp.bfloat16), ar_ref[...],
                         (((1,), (1,)), ((), ())),
                         preferred_element_type=f32)                # (tq, H)

    alphas = []
    for hd in range(H):
        # e[dst, src]; softmax over src = the lane axis (cheap reductions).
        e = er[:, hd:hd + 1] + el[hd:hd + 1, :]                     # (tq, N)
        e = jnp.where(e > 0.0, e, 0.2 * e)                          # LeakyReLU
        e = e + mask                                                # mask edges
        e = e - jnp.max(e, axis=-1, keepdims=True)
        p = jnp.exp(e.astype(exp_dtype)).astype(f32)
        inv = pl.reciprocal(jnp.sum(p, axis=-1, keepdims=True), approx=True)
        alphas.append((p * inv).astype(jnp.bfloat16))               # (tq, N)

    # Head-batched weighted sum: ONE lane-dense MXU contraction producing the
    # full (tq, H*D) output instead of H narrow (tq, D) matmuls + concat.
    #   alpha_cat[q, h*N + s]            = alpha_h[q, s]
    #   feat_blk[h*N + s, h*D:(h+1)*D]   = feat_src[s, h*D:(h+1)*D]  (else 0)
    alpha_cat = jnp.concatenate(alphas, axis=-1)                    # (tq, H*N)
    lane = lax.broadcasted_iota(jnp.int32, (1, HD), 1)
    zeros = jnp.zeros_like(feat_src_bf)
    feat_blk = jnp.concatenate(
        [jnp.where((lane >= hd * D) & (lane < (hd + 1) * D), feat_src_bf, zeros)
         for hd in range(H)], axis=0)                               # (H*N, HD)
    acc = jnp.dot(alpha_cat, feat_blk, preferred_element_type=f32)  # (tq, HD)
    out_ref[...] = (acc + bias_ref[...]).astype(out_ref.dtype)


# ----------------------------------------------------------------------------
# Stage 3: decoders, tiled over dst-row blocks, lane-dense outputs
# ----------------------------------------------------------------------------
def _decoder_kernel(se_full_ref, se_tile_ref, femb_ref,
                    struct_hat_ref, feat_hat_t_ref):
    f32 = jnp.float32
    se_full = se_full_ref[...]          # (N, H2)  bf16
    se_tile = se_tile_ref[...]          # (tq, H2) bf16
    femb = femb_ref[...]                # (F, H2)  bf16
    # struct_hat tile = sigmoid(se_tile @ se_full^T): (tq, N), N on lanes.
    struct_hat_ref[...] = jax.nn.sigmoid(
        lax.dot_general(se_tile, se_full, (((1,), (1,)), ((), ())),
                        preferred_element_type=f32)).astype(struct_hat_ref.dtype)
    # feat_hat emitted transposed (F, tq) so N sits on the lane axis.
    feat_hat_t_ref[...] = jax.nn.sigmoid(
        lax.dot_general(femb, se_tile, (((1,), (1,)), ((), ())),
                        preferred_element_type=f32)).astype(feat_hat_t_ref.dtype)


# ----------------------------------------------------------------------------
# Wrapper
# ----------------------------------------------------------------------------
def _full_spec(shape):
    nd = len(shape)
    return pl.BlockSpec(shape, lambda *args, _nd=nd: (0,) * _nd)


def _pack_attn_rows(attn):
    """(H, D) -> (H, H*D) block matrix: row h holds attn[h] at cols h*D:(h+1)*D."""
    H, D = attn.shape
    eye = jnp.eye(H, dtype=attn.dtype)
    return (eye[:, :, None] * attn[None, :, :]).reshape(H, H * D)


def _pick_tile(n):
    for t in (256, 128):
        if n % t == 0:
            return t
    return n          # small graphs: whole-array (single tile)


def anomaly_dae_forward(params, adj, h, *, tile_rows=None):
    num_layer = len(params["gat"])
    H = params["num_head"]
    D = params["head_dim"]
    HD = H * D
    N, F = h.shape
    H1 = params["w1"].shape[1]
    H2 = params["w2b"].shape[1]
    assert HD == H2

    tq = tile_rows if tile_rows is not None else _pick_tile(N)
    assert N % tq == 0, "tile_rows must divide num_node"
    grid = (N // tq,)

    bf = jnp.bfloat16
    h_bf = h.astype(bf)
    # Pre-transposed ADDITIVE adjacency mask: bias[dst, src] = 0 edge / -1e9.
    adj_bias = jnp.where(adj.T > 0.0, 0.0, _NEG_BIG).astype(bf)

    cp_seq = pltpu.CompilerParams(dimension_semantics=("arbitrary",),
                                  vmem_limit_bytes=_VMEM_LIMIT)
    cp_par = pltpu.CompilerParams(dimension_semantics=("parallel",),
                                  vmem_limit_bytes=_VMEM_LIMIT)

    # ---- stage 1: hidden1(h) and hidden2(h^T) ----
    h_x0, feat_emb = pl.pallas_call(
        _prep_kernel,
        out_shape=(jax.ShapeDtypeStruct((N, H1), bf),
                   jax.ShapeDtypeStruct((F, H2), bf)),
        grid=(1,),
        in_specs=[_full_spec((N, F)), _full_spec((F, H1)), _full_spec((1, H1)),
                  _full_spec((N, H1)), _full_spec((1, H1)),
                  _full_spec((H1, H2)), _full_spec((1, H2))],
        out_specs=(_full_spec((N, H1)), _full_spec((F, H2))),
        compiler_params=cp_seq,
    )(h_bf, params["w1"].astype(bf), params["b1"],
      params["w2a"].astype(bf), params["b2a"],
      params["w2b"].astype(bf), params["b2b"])

    # ---- stage 2: GAT encoder stack (one dst-tiled pallas_call per layer) ----
    exp_dtype = _exp_dtype()
    h_x = h_x0
    for layer in params["gat"]:
        d_in = layer["w"].shape[0]
        al_blk = _pack_attn_rows(layer["attn_l"]).astype(bf)
        ar_blk = _pack_attn_rows(layer["attn_r"]).astype(bf)
        kernel = functools.partial(_gat_layer_kernel, num_head=H, head_dim=D,
                                   exp_dtype=exp_dtype)
        h_x = pl.pallas_call(
            kernel,
            out_shape=jax.ShapeDtypeStruct((N, HD), bf),
            grid=grid,
            in_specs=[
                pl.BlockSpec((N, d_in), lambda i: (0, 0)),    # x, src side (resident)
                pl.BlockSpec((tq, d_in), lambda i: (i, 0)),   # x, dst rows of tile
                pl.BlockSpec((tq, N), lambda i: (i, 0)),      # adj bias tile (streamed)
                pl.BlockSpec((d_in, HD), lambda i: (0, 0)),   # W        (bf16)
                pl.BlockSpec((H, HD), lambda i: (0, 0)),      # attn_l block
                pl.BlockSpec((H, HD), lambda i: (0, 0)),      # attn_r block
                pl.BlockSpec((1, HD), lambda i: (0, 0)),      # bias
            ],
            out_specs=pl.BlockSpec((tq, HD), lambda i: (i, 0)),
            compiler_params=cp_par,
        )(h_x, h_x, adj_bias, layer["w"].astype(bf), al_blk, ar_blk,
          layer["bias"])
    struct_emb = h_x                                            # (N, H2) bf16

    # ---- stage 3: decoders ----
    # NOTE: outputs kept f32 to match the reference; switch out_shape dtypes to
    # bf16 to halve the dominant struct_hat writeback if scoring tolerates it.
    struct_hat, feat_hat_t = pl.pallas_call(
        _decoder_kernel,
        out_shape=(jax.ShapeDtypeStruct((N, N), jnp.float32),
                   jax.ShapeDtypeStruct((F, N), jnp.float32)),
        grid=grid,
        in_specs=[pl.BlockSpec((N, H2), lambda i: (0, 0)),      # struct_emb (resident)
                  pl.BlockSpec((tq, H2), lambda i: (i, 0)),     # struct_emb tile
                  pl.BlockSpec((F, H2), lambda i: (0, 0))],     # feat_emb
        out_specs=(pl.BlockSpec((tq, N), lambda i: (i, 0)),
                   pl.BlockSpec((F, tq), lambda i: (0, i))),
        compiler_params=cp_par,
    )(struct_emb, struct_emb, feat_emb)

    # feat_hat was emitted transposed (lane-dense); restore (N, F) layout.
    return struct_hat, feat_hat_t.T


# ----------------------------------------------------------------------------
# Parameter init (matches the PyTorch module's parameter shapes)
# ----------------------------------------------------------------------------
def init_params(key, *, feat_size, num_node, hidden1, hidden2, num_layer, num_head):
    head_dim = hidden2 // num_head
    keys = jax.random.split(key, 8 + 4 * num_layer)
    k = iter(range(len(keys)))
    s = 0.1

    def rnd(shape):
        return (s * jax.random.normal(keys[next(k)], shape)).astype(jnp.float32)

    params = {
        "num_head": num_head,
        "head_dim": head_dim,
        "w1": rnd((feat_size, hidden1)),
        "b1": rnd((1, hidden1)),
        "w2a": rnd((num_node, hidden1)),
        "b2a": rnd((1, hidden1)),
        "w2b": rnd((hidden1, hidden2)),
        "b2b": rnd((1, hidden2)),
        "gat": [],
    }
    in_dims = [hidden1] + [hidden2] * (num_layer - 1)
    for d_in in in_dims:
        params["gat"].append({
            "w": rnd((d_in, num_head * head_dim)),
            "attn_l": rnd((num_head, head_dim)),
            "attn_r": rnd((num_head, head_dim)),
            "bias": rnd((1, num_head * head_dim)),
        })
    return params


if __name__ == "__main__":
    feat_size, num_node = 16, 256          # N=256 so the dst grid has 2 tiles
    hidden1, hidden2 = 32, 16
    num_layer, num_head = 2, 4

    key = jax.random.PRNGKey(0)
    k_p, k_h, k_a = jax.random.split(key, 3)

    params = init_params(k_p, feat_size=feat_size, num_node=num_node,
                         hidden1=hidden1, hidden2=hidden2,
                         num_layer=num_layer, num_head=num_head)

    h = jax.random.normal(k_h, (num_node, feat_size), dtype=jnp.float32)

    # Deterministic symmetric adjacency with self-loops (every node has
    # in-edges; DGL-style GAT softmax is undefined for zero-in-degree nodes).
    a = (jax.random.uniform(k_a, (num_node, num_node)) < 0.05).astype(jnp.float32)
    adj = jnp.maximum(a, a.T)
    adj = jnp.maximum(adj, jnp.eye(num_node, dtype=jnp.float32))

    struct_hat, feat_hat = anomaly_dae_forward(params, adj, h, tile_rows=128)
    jax.block_until_ready((struct_hat, feat_hat))

    assert struct_hat.shape == (num_node, num_node)
    assert feat_hat.shape == (num_node, feat_size)
    print("KERNEL_OK")
</pallas_src>

<mosaic_0001>
module attributes {stable_mosaic.version = 11 : i64} {
  func.func @_prep_kernel(%arg0: i32, %arg1: memref<256x16xbf16, #tpu.memory_space<vmem>>, %arg2: memref<16x32xbf16, #tpu.memory_space<vmem>>, %arg3: memref<1x32xf32, #tpu.memory_space<vmem>>, %arg4: memref<256x32xbf16, #tpu.memory_space<vmem>>, %arg5: memref<1x32xf32, #tpu.memory_space<vmem>>, %arg6: memref<32x16xbf16, #tpu.memory_space<vmem>>, %arg7: memref<1x16xf32, #tpu.memory_space<vmem>>, %arg8: memref<256x32xbf16, #tpu.memory_space<vmem>>, %arg9: memref<16x16xbf16, #tpu.memory_space<vmem>>) attributes {dimension_semantics = [#tpu.dimension_semantics<arbitrary>], iteration_bounds = array<i64: 1>, scalar_prefetch = 0 : i64, scratch_operands = 0 : i64, tpu.core_type = #tpu.core_type<tc>, window_params = [{pipeline_mode = #tpu.pipeline_mode<synchronous>, transform_indices = @transform_0, window_bounds = array<i64: 256, 16>}, {pipeline_mode = #tpu.pipeline_mode<synchronous>, transform_indices = @transform_1, window_bounds = array<i64: 16, 32>}, {pipeline_mode = #tpu.pipeline_mode<synchronous>, transform_indices = @transform_2, window_bounds = array<i64: 1, 32>}, {pipeline_mode = #tpu.pipeline_mode<synchronous>, transform_indices = @transform_3, window_bounds = array<i64: 256, 32>}, {pipeline_mode = #tpu.pipeline_mode<synchronous>, transform_indices = @transform_4, window_bounds = array<i64: 1, 32>}, {pipeline_mode = #tpu.pipeline_mode<synchronous>, transform_indices = @transform_5, window_bounds = array<i64: 32, 16>}, {pipeline_mode = #tpu.pipeline_mode<synchronous>, transform_indices = @transform_6, window_bounds = array<i64: 1, 16>}, {pipeline_mode = #tpu.pipeline_mode<synchronous>, transform_indices = @transform_7, window_bounds = array<i64: 256, 32>}, {pipeline_mode = #tpu.pipeline_mode<synchronous>, transform_indices = @transform_8, window_bounds = array<i64: 16, 16>}]} {
    %c0 = arith.constant 0 : index
    %c0_0 = arith.constant 0 : index
    %0 = vector.load %arg1[%c0, %c0_0] : memref<256x16xbf16, #tpu.memory_space<vmem>>, vector<256x16xbf16>
    %c0_1 = arith.constant 0 : index
    %c0_2 = arith.constant 0 : index
    %1 = vector.load %arg2[%c0_1, %c0_2] : memref<16x32xbf16, #tpu.memory_space<vmem>>, vector<16x32xbf16>
    %cst = arith.constant dense<0.000000e+00> : vector<256x32xf32>
    %2 = tpu.matmul %0, %1, %cst {dimension_numbers = #tpu.dot_dimension_numbers<[1], [0], [0], [1], [0, 0, 1, 1], [], []>} : vector<256x16xbf16>, vector<16x32xbf16>, vector<256x32xf32> -> vector<256x32xf32>
    %c0_3 = arith.constant 0 : index
    %c0_4 = arith.constant 0 : index
    %3 = vector.load %arg3[%c0_3, %c0_4] : memref<1x32xf32, #tpu.memory_space<vmem>>, vector<1x32xf32>
    %4 = vector.broadcast %3 : vector<1x32xf32> to vector<256x32xf32>
    %5 = arith.addf %2, %4 : vector<256x32xf32>
    %cst_5 = arith.constant 0.000000e+00 : f32
    %6 = vector.broadcast %cst_5 : f32 to vector<256x32xf32>
    %7 = arith.maximumf %5, %6 : vector<256x32xf32>
    %8 = arith.truncf %7 : vector<256x32xf32> to vector<256x32xbf16>
    %c0_6 = arith.constant 0 : index
    %c0_7 = arith.constant 0 : index
    %9 = vector.load %arg8[%c0_6, %c0_7] : memref<256x32xbf16, #tpu.memory_space<vmem>>, vector<256x32xbf16>
    tpu.vector_store %arg8[%c0_6, %c0_7], %8 {strides = array<i32>} : memref<256x32xbf16, #tpu.memory_space<vmem>>, vector<256x32xbf16>,
    %c0_8 = arith.constant 0 : index
    %c0_9 = arith.constant 0 : index
    %10 = vector.load %arg4[%c0_8, %c0_9] : memref<256x32xbf16, #tpu.memory_space<vmem>>, vector<256x32xbf16>
    %cst_10 = arith.constant dense<0.000000e+00> : vector<16x32xf32>
    %11 = tpu.matmul %0, %10, %cst_10 {dimension_numbers = #tpu.dot_dimension_numbers<[0], [0], [1], [1], [0, 1, 1, 1], [], []>} : vector<256x16xbf16>, vector<256x32xbf16>, vector<16x32xf32> -> vector<16x32xf32>
    %c0_11 = arith.constant 0 : index
    %c0_12 = arith.constant 0 : index
    %12 = vector.load %arg5[%c0_11, %c0_12] : memref<1x32xf32, #tpu.memory_space<vmem>>, vector<1x32xf32>
    %13 = vector.broadcast %12 : vector<1x32xf32> to vector<16x32xf32>
    %14 = arith.addf %11, %13 : vector<16x32xf32>
    %cst_13 = arith.constant 0.000000e+00 : f32
    %15 = vector.broadcast %cst_13 : f32 to vector<16x32xf32>
    %16 = arith.maximumf %14, %15 : vector<16x32xf32>
    %17 = arith.truncf %16 : vector<16x32xf32> to vector<16x32xbf16>
    %c0_14 = arith.constant 0 : index
    %c0_15 = arith.constant 0 : index
    %18 = vector.load %arg6[%c0_14, %c0_15] : memref<32x16xbf16, #tpu.memory_space<vmem>>, vector<32x16xbf16>
    %cst_16 = arith.constant dense<0.000000e+00> : vector<16x16xf32>
    %19 = tpu.matmul %17, %18, %cst_16 {dimension_numbers = #tpu.dot_dimension_numbers<[1], [0], [0], [1], [0, 0, 1, 1], [], []>} : vector<16x32xbf16>, vector<32x16xbf16>, vector<16x16xf32> -> vector<16x16xf32>
    %c0_17 = arith.constant 0 : index
    %c0_18 = arith.constant 0 : index
    %20 = vector.load %arg7[%c0_17, %c0_18] : memref<1x16xf32, #tpu.memory_space<vmem>>, vector<1x16xf32>
    %21 = vector.broadcast %20 : vector<1x16xf32> to vector<16x16xf32>
    %22 = arith.addf %19, %21 : vector<16x16xf32>
    %23 = arith.truncf %22 : vector<16x16xf32> to vector<16x16xbf16>
    %c0_19 = arith.constant 0 : index
    %c0_20 = arith.constant 0 : index
    %24 = vector.load %arg9[%c0_19, %c0_20] : memref<16x16xbf16, #tpu.memory_space<vmem>>, vector<16x16xbf16>
    tpu.vector_store %arg9[%c0_19, %c0_20], %23 {strides = array<i32>} : memref<16x16xbf16, #tpu.memory_space<vmem>>, vector<16x16xbf16>,
    return
  }
  func.func @transform_0(%arg0: i32) -> (i32, i32) {
    %c0_i32 = arith.constant 0 : i32
    %c0_i32_0 = arith.constant 0 : i32
    %c0_i32_1 = arith.constant 0 : i32
    return %c0_i32, %c0_i32_0 : i32, i32
  }
  func.func @transform_1(%arg0: i32) -> (i32, i32) {
    %c0_i32 = arith.constant 0 : i32
    %c0_i32_0 = arith.constant 0 : i32
    %c0_i32_1 = arith.constant 0 : i32
    return %c0_i32, %c0_i32_0 : i32, i32
  }
  func.func @transform_2(%arg0: i32) -> (i32, i32) {
    %c0_i32 = arith.constant 0 : i32
    %c0_i32_0 = arith.constant 0 : i32
    %c0_i32_1 = arith.constant 0 : i32
    return %c0_i32, %c0_i32_0 : i32, i32
  }
  func.func @transform_3(%arg0: i32) -> (i32, i32) {
    %c0_i32 = arith.constant 0 : i32
    %c0_i32_0 = arith.constant 0 : i32
    %c0_i32_1 = arith.constant 0 : i32
    return %c0_i32, %c0_i32_0 : i32, i32
  }
  func.func @transform_4(%arg0: i32) -> (i32, i32) {
    %c0_i32 = arith.constant 0 : i32
    %c0_i32_0 = arith.constant 0 : i32
    %c0_i32_1 = arith.constant 0 : i32
    return %c0_i32, %c0_i32_0 : i32, i32
  }
  func.func @transform_5(%arg0: i32) -> (i32, i32) {
    %c0_i32 = arith.constant 0 : i32
    %c0_i32_0 = arith.constant 0 : i32
    %c0_i32_1 = arith.constant 0 : i32
    return %c0_i32, %c0_i32_0 : i32, i32
  }
  func.func @transform_6(%arg0: i32) -> (i32, i32) {
    %c0_i32 = arith.constant 0 : i32
    %c0_i32_0 = arith.constant 0 : i32
    %c0_i32_1 = arith.constant 0 : i32
    return %c0_i32, %c0_i32_0 : i32, i32
  }
  func.func @transform_7(%arg0: i32) -> (i32, i32) {
    %c0_i32 = arith.constant 0 : i32
    %c0_i32_0 = arith.constant 0 : i32
    %c0_i32_1 = arith.constant 0 : i32
    return %c0_i32, %c0_i32_0 : i32, i32
  }
  func.func @transform_8(%arg0: i32) -> (i32, i32) {
    %c0_i32 = arith.constant 0 : i32
    %c0_i32_0 = arith.constant 0 : i32
    %c0_i32_1 = arith.constant 0 : i32
    return %c0_i32, %c0_i32_0 : i32, i32
  }
}

</mosaic_0001>

<llo_original>
// kernel: tpu_custom_call.1
$region0: #{tpu_custom_call.1}
  #allocation0 [shape = 'u32[]', space=smem, size = 0x4, offset = 0x4, fixed_abs, tag = 'smem constant byte address 0x4 - core index']
  #allocation1 [shape = 'u32[144,128]{1,0:T(1,128)}', space=vmem, size = 0x12000, scoped, tag = 'internal scratch']
  %s0 = inlined_call_operand.vmem [shape: bf16[256,16], index: 0, kind: input, shape index: {}]
  %s1 = inlined_call_operand.vmem [shape: bf16[16,32], index: 1, kind: input, shape index: {}]
  %s2 = inlined_call_operand.vmem [shape: f32[1,32], index: 2, kind: input, shape index: {}]
  %s3 = inlined_call_operand.vmem [shape: bf16[256,32], index: 3, kind: input, shape index: {}]
  %s4 = inlined_call_operand.vmem [shape: f32[1,32], index: 4, kind: input, shape index: {}]
  %s5 = inlined_call_operand.vmem [shape: bf16[32,16], index: 5, kind: input, shape index: {}]
  %s6 = inlined_call_operand.vmem [shape: f32[1,16], index: 6, kind: input, shape index: {}]
  %s7 = inlined_call_operand.vmem [shape: bf16[256,32], index: 7, kind: output, shape index: {0}]
  %s8 = inlined_call_operand.hbm [shape: bf16[16,16], index: 8, kind: output, shape index: {1}]
  %9 = xla_tuple %s7, %s8
  %s10 = sld [smem:[#allocation0]]
  $region46: #{tpu_custom_call.1} parent=0
    _
  %s12 = ssub.s32 1, %s10
  %s13 = scalar_select 0, %s12, %s10
  $region1: #{tpu_custom_call.1} parent=0
    #allocation2 [shape = 'u8[4096]{0}', space=vmem, size = 0x1000, scoped, tag = 'output window, operand 1, single buffered']
    #allocation3 [shape = 's32[1]{0}', space=sflag, size = 0x4, scoped, tag = 'scoped memory for tpu_custom_call.1']
    %14 = vsyncpa [#allocation3], 0
    // Predicated region
    $region2: #{tpu_custom_call.1} parent=1 // pred_check
      _
    $region3: #{tpu_custom_call.1} parent=1 // pred_check_branch
      %16 = sbr.rel (0) target = $region5
    $region4: #{tpu_custom_call.1} parent=1 // pred_region
      _
    $region5: #{tpu_custom_call.1} parent=1 // pred_fallthru
      _
    // Predicated region
    $region6: #{tpu_custom_call.1} parent=1 // pred_check
      _
    $region7: #{tpu_custom_call.1} parent=1 // pred_check_branch
      %18 = sbr.rel (0) target = $region9
    $region8: #{tpu_custom_call.1} parent=1 // pred_region
      _
    $region9: #{tpu_custom_call.1} parent=1 // pred_fallthru
      _
    // Predicated region
    $region10: #{tpu_custom_call.1} parent=1 // pred_check
      _
    $region11: #{tpu_custom_call.1} parent=1 // pred_check_branch
      %20 = sbr.rel (0) target = $region13
    $region12: #{tpu_custom_call.1} parent=1 // pred_region
      _
    $region13: #{tpu_custom_call.1} parent=1 // pred_fallthru
      _
    // Predicated region
    $region14: #{tpu_custom_call.1} parent=1 // pred_check
      _
    $region15: #{tpu_custom_call.1} parent=1 // pred_check_branch
      %22 = sbr.rel (0) target = $region17
    $region16: #{tpu_custom_call.1} parent=1 // pred_region
      _
    $region17: #{tpu_custom_call.1} parent=1 // pred_fallthru
      _
    // Predicated region
    $region18: #{tpu_custom_call.1} parent=1 // pred_check
      _
    $region19: #{tpu_custom_call.1} parent=1 // pred_check_branch
      %24 = sbr.rel (0) target = $region21
    $region20: #{tpu_custom_call.1} parent=1 // pred_region
      _
    $region21: #{tpu_custom_call.1} parent=1 // pred_fallthru
      _
    // Predicated region
    $region22: #{tpu_custom_call.1} parent=1 // pred_check
      _
    $region23: #{tpu_custom_call.1} parent=1 // pred_check_branch
      %26 = sbr.rel (0) target = $region25
    $region24: #{tpu_custom_call.1} parent=1 // pred_region
      _
    $region25: #{tpu_custom_call.1} parent=1 // pred_fallthru
      _
    // Predicated region
    $region26: #{tpu_custom_call.1} parent=1 // pred_check
      _
    $region27: #{tpu_custom_call.1} parent=1 // pred_check_branch
      %28 = sbr.rel (0) target = $region29
    $region28: #{tpu_custom_call.1} parent=1 // pred_region
      _
    $region29: #{tpu_custom_call.1} parent=1 // pred_fallthru
      _
    %v30 = vld [vmem:[%s0] sm:$0xf]
    %v31 = vld [vmem:[%s0 + $0x4] sm:$0xf]
    %v32 = vld [vmem:[%s0 + $0x8] sm:$0xf]
    %v33 = vld [vmem:[%s0 + $0xc] sm:$0xf]
    %v34 = vld [vmem:[%s0 + $0x10] sm:$0xf]
    %v35 = vld [vmem:[%s0 + $0x14] sm:$0xf]
    %v36 = vld [vmem:[%s0 + $0x18] sm:$0xf]
    %v37 = vld [vmem:[%s0 + $0x1c] sm:$0xf]
    %v38 = vld [vmem:[%s0 + $0x20] sm:$0xf]
    %v39 = vld [vmem:[%s0 + $0x24] sm:$0xf]
    %v40 = vld [vmem:[%s0 + $0x28] sm:$0xf]
    %v41 = vld [vmem:[%s0 + $0x2c] sm:$0xf]
    %v42 = vld [vmem:[%s0 + $0x30] sm:$0xf]
    %v43 = vld [vmem:[%s0 + $0x34] sm:$0xf]
    %v44 = vld [vmem:[%s0 + $0x38] sm:$0xf]
    %v45 = vld [vmem:[%s0 + $0x3c] sm:$0xf]
    %v46 = vld [vmem:[%s0 + $0x40] sm:$0xf]
    %v47 = vld [vmem:[%s0 + $0x44] sm:$0xf]
    %v48 = vld [vmem:[%s0 + $0x48] sm:$0xf]
    %v49 = vld [vmem:[%s0 + $0x4c] sm:$0xf]
    %v50 = vld [vmem:[%s0 + $0x50] sm:$0xf]
    %v51 = vld [vmem:[%s0 + $0x54] sm:$0xf]
    %v52 = vld [vmem:[%s0 + $0x58] sm:$0xf]
    %v53 = vld [vmem:[%s0 + $0x5c] sm:$0xf]
    %v54 = vld [vmem:[%s0 + $0x60] sm:$0xf]
    %v55 = vld [vmem:[%s0 + $0x64] sm:$0xf]
    %v56 = vld [vmem:[%s0 + $0x68] sm:$0xf]
    %v57 = vld [vmem:[%s0 + $0x6c] sm:$0xf]
    %v58 = vld [vmem:[%s0 + $0x70] sm:$0xf]
    %v59 = vld [vmem:[%s0 + $0x74] sm:$0xf]
    %v60 = vld [vmem:[%s0 + $0x78] sm:$0xf]
    %v61 = vld [vmem:[%s0 + $0x7c] sm:$0xf]
    %v62 = vld [vmem:[%s1] sm:$0xf]
    %v63 = vld [vmem:[%s1 + $0x4] sm:$0xf]
    %v64 = vld [vmem:[%s2] sm:$0x1]
    %v66 = vlaneseq
    %v67 = vshrl.u32 %v66, 7
    %v68 = vsub.s32 0, %v67
    %v69 = vrot.slane %v64, %v68
    %v103 = vunpack.c.l.b16 %v30
    %v104 = vunpack.c.l.b16 %v31
    %v105 = vunpack.c.l.b16 %v32
    %v106 = vunpack.c.l.b16 %v33
    %v107 = vunpack.c.l.b16 %v34
    %v108 = vunpack.c.l.b16 %v35
    %v109 = vunpack.c.l.b16 %v36
    %v110 = vunpack.c.l.b16 %v37
    %v111 = vunpack.c.l.b16 %v38
    %v112 = vunpack.c.l.b16 %v39
    %v113 = vunpack.c.l.b16 %v40
    %v114 = vunpack.c.l.b16 %v41
    %v115 = vunpack.c.l.b16 %v42
    %v116 = vunpack.c.l.b16 %v43
    %v117 = vunpack.c.l.b16 %v44
    %v118 = vunpack.c.l.b16 %v45
    %v119 = vunpack.c.l.b16 %v46
    %v120 = vunpack.c.l.b16 %v47
    %v121 = vunpack.c.l.b16 %v48
    %v122 = vunpack.c.l.b16 %v49
    %v123 = vunpack.c.l.b16 %v50
    %v124 = vunpack.c.l.b16 %v51
    %v125 = vunpack.c.l.b16 %v52
    %v126 = vunpack.c.l.b16 %v53
    %v127 = vunpack.c.l.b16 %v54
    %v128 = vunpack.c.l.b16 %v55
    %v129 = vunpack.c.l.b16 %v56
    %v130 = vunpack.c.l.b16 %v57
    %v131 = vunpack.c.l.b16 %v58
    %v132 = vunpack.c.l.b16 %v59
    %v133 = vunpack.c.l.b16 %v60
    %v134 = vunpack.c.l.b16 %v61
    %v135 = vpack.c.b16 %v104, %v103
    %v136 = vpack.c.b16 %v106, %v105
    %v137 = vpack.c.b16 %v108, %v107
    %v138 = vpack.c.b16 %v110, %v109
    %v139 = vpack.c.b16 %v112, %v111
    %v140 = vpack.c.b16 %v114, %v113
    %v141 = vpack.c.b16 %v116, %v115
    %v142 = vpack.c.b16 %v118, %v117
    %v143 = vpack.c.b16 %v120, %v119
    %v144 = vpack.c.b16 %v122, %v121
    %v145 = vpack.c.b16 %v124, %v123
    %v146 = vpack.c.b16 %v126, %v125
    %v147 = vpack.c.b16 %v128, %v127
    %v148 = vpack.c.b16 %v130, %v129
    %v149 = vpack.c.b16 %v132, %v131
    %v150 = vpack.c.b16 %v134, %v133
    %v153 = vunpack.c.l.b16 %v62
    %v154 = vunpack.c.l.b16 %v63
    %v155 = vpack.c.b16 %v154, %v153
    %vm157 = vcmask 130048
    %v159 = vsel %vm157, %v135, 0
    %v162 = vsel %vm157, %v136, 0
    %v165 = vsel %vm157, %v137, 0
    %v168 = vsel %vm157, %v138, 0
    %v171 = vsel %vm157, %v139, 0
    %v174 = vsel %vm157, %v140, 0
    %v177 = vsel %vm157, %v141, 0
    %v180 = vsel %vm157, %v142, 0
    %v183 = vsel %vm157, %v143, 0
    %v186 = vsel %vm157, %v144, 0
    %v189 = vsel %vm157, %v145, 0
    %v192 = vsel %vm157, %v146, 0
    %v195 = vsel %vm157, %v147, 0
    %v198 = vsel %vm157, %v148, 0
    %v201 = vsel %vm157, %v149, 0
    %v204 = vsel %vm157, %v150, 0
    %206 = vmatprep.subr.bf16.mxu0 0
    %207 = vmatpush1.bf16.msra.mxu0 0
    %208 = vmatprep.subr.bf16.mxu0 0
    %209 = vmatpush1.bf16.msra.mxu0 0
    %210 = vmatprep.subr.bf16.mxu0 0
    %211 = vmatpush1.bf16.msra.mxu0 0
    %212 = vmatprep.subr.bf16.mxu0 0
    %213 = vmatpush1.bf16.msra.mxu0 0
    %214 = vmatprep.subr.bf16.mxu0 0
    %215 = vmatpush1.bf16.msra.mxu0 0
    %216 = vmatprep.subr.bf16.mxu0 0
    %217 = vmatpush1.bf16.msra.mxu0 0
    %218 = vmatprep.subr.bf16.mxu0 0
    %219 = vmatpush1.bf16.msra.mxu0 0
    %220 = vmatprep.subr.bf16.mxu0 0
    %221 = vmatpush1.bf16.msra.mxu0 %v155
    %222 = vmatprep.subr.bf16.mxu0 0
    %223 = vmatpush2.bf16.msra.mxu0 0
    %224 = vmatprep.subr.bf16.mxu0 0
    %225 = vmatpush2.bf16.msra.mxu0 0
    %226 = vmatprep.subr.bf16.mxu0 0
    %227 = vmatpush2.bf16.msra.mxu0 0
    %228 = vmatprep.subr.bf16.mxu0 0
    %229 = vmatpush2.bf16.msra.mxu0 0
    %230 = vmatprep.subr.bf16.mxu0 0
    %231 = vmatpush2.bf16.msra.mxu0 0
    %232 = vmatprep.subr.bf16.mxu0 0
    %233 = vmatpush2.bf16.msra.mxu0 0
    %234 = vmatprep.subr.bf16.mxu0 0
    %235 = vmatpush2.bf16.msra.mxu0 0
    %236 = vmatprep.subr.bf16.mxu0 0
    %237 = vmatpush2.bf16.msra.mxu0 0
    %238 = vmatprep.mubr.bf16.mxu0 0
    %239 = vmatmul.mubr.bf16.gmra.mxu0 %v159
    %v240 = vpop.f32.mrf.mxu0
    %v241 = vadd.f32 %v69, %v240
    %v242 = vpop.f32.mrf.mxu0
    %v243 = vpop.f32.mrf.mxu0
    %v244 = vadd.f32 %v69, %v243
    %v245 = vpop.f32.mrf.mxu0
    %246 = vmatprep.mubr.bf16.mxu0 0
    %247 = vmatmul.mubr.bf16.gmra.mxu0 %v162
    %v248 = vpop.f32.mrf.mxu0
    %v249 = vadd.f32 %v69, %v248
    %v250 = vpop.f32.mrf.mxu0
    %v251 = vpop.f32.mrf.mxu0
    %v252 = vadd.f32 %v69, %v251
    %v253 = vpop.f32.mrf.mxu0
    %254 = vmatprep.mubr.bf16.mxu0 0
    %255 = vmatmul.mubr.bf16.gmra.mxu0 %v165
    %v256 = vpop.f32.mrf.mxu0
    %v257 = vadd.f32 %v69, %v256
    %v258 = vpop.f32.mrf.mxu0
    %v259 = vpop.f32.mrf.mxu0
    %v260 = vadd.f32 %v69, %v259
    %v261 = vpop.f32.mrf.mxu0
    %262 = vmatprep.mubr.bf16.mxu0 0
    %263 = vmatmul.mubr.bf16.gmra.mxu0 %v168
    %v264 = vpop.f32.mrf.mxu0
    %v265 = vadd.f32 %v69, %v264
    %v266 = vpop.f32.mrf.mxu0
    %v267 = vpop.f32.mrf.mxu0
    %v268 = vadd.f32 %v69, %v267
    %v269 = vpop.f32.mrf.mxu0
    %270 = vmatprep.mubr.bf16.mxu0 0
    %271 = vmatmul.mubr.bf16.gmra.mxu0 %v171
    %v272 = vpop.f32.mrf.mxu0
    %v273 = vadd.f32 %v69, %v272
    %v274 = vpop.f32.mrf.mxu0
    %v275 = vpop.f32.mrf.mxu0
    %v276 = vadd.f32 %v69, %v275
    %v277 = vpop.f32.mrf.mxu0
    %278 = vmatprep.mubr.bf16.mxu0 0
    %279 = vmatmul.mubr.bf16.gmra.mxu0 %v174
    %v280 = vpop.f32.mrf.mxu0
    %v281 = vadd.f32 %v69, %v280
    %v282 = vpop.f32.mrf.mxu0
    %v283 = vpop.f32.mrf.mxu0
    %v284 = vadd.f32 %v69, %v283
    %v285 = vpop.f32.mrf.mxu0
    %286 = vmatprep.mubr.bf16.mxu0 0
    %287 = vmatmul.mubr.bf16.gmra.mxu0 %v177
    %v288 = vpop.f32.mrf.mxu0
    %v289 = vadd.f32 %v69, %v288
    %v290 = vpop.f32.mrf.mxu0
    %v291 = vpop.f32.mrf.mxu0
    %v292 = vadd.f32 %v69, %v291
    %v293 = vpop.f32.mrf.mxu0
    %294 = vmatprep.mubr.bf16.mxu0 0
    %295 = vmatmul.mubr.bf16.gmra.mxu0 %v180
    %v296 = vpop.f32.mrf.mxu0
    %v297 = vadd.f32 %v69, %v296
    %v298 = vpop.f32.mrf.mxu0
    %v299 = vpop.f32.mrf.mxu0
    %v300 = vadd.f32 %v69, %v299
    %v301 = vpop.f32.mrf.mxu0
    %302 = vmatprep.mubr.bf16.mxu0 0
    %303 = vmatmul.mubr.bf16.gmra.mxu0 %v183
    %v304 = vpop.f32.mrf.mxu0
    %v305 = vadd.f32 %v69, %v304
    %v306 = vpop.f32.mrf.mxu0
    %v307 = vpop.f32.mrf.mxu0
    %v308 = vadd.f32 %v69, %v307
    %v309 = vpop.f32.mrf.mxu0
    %310 = vmatprep.mubr.bf16.mxu0 0
    %311 = vmatmul.mubr.bf16.gmra.mxu0 %v186
    %v312 = vpop.f32.mrf.mxu0
    %v313 = vadd.f32 %v69, %v312
    %v314 = vpop.f32.mrf.mxu0
    %v315 = vpop.f32.mrf.mxu0
    %v316 = vadd.f32 %v69, %v315
    %v317 = vpop.f32.mrf.mxu0
    %318 = vmatprep.mubr.bf16.mxu0 0
    %319 = vmatmul.mubr.bf16.gmra.mxu0 %v189
    %v320 = vpop.f32.mrf.mxu0
    %v321 = vadd.f32 %v69, %v320
    %v322 = vpop.f32.mrf.mxu0
    %v323 = vpop.f32.mrf.mxu0
    %v324 = vadd.f32 %v69, %v323
    %v325 = vpop.f32.mrf.mxu0
    %326 = vmatprep.mubr.bf16.mxu0 0
    %327 = vmatmul.mubr.bf16.gmra.mxu0 %v192
    %v328 = vpop.f32.mrf.mxu0
    %v329 = vadd.f32 %v69, %v328
    %v330 = vpop.f32.mrf.mxu0
    %v331 = vpop.f32.mrf.mxu0
    %v332 = vadd.f32 %v69, %v331
    %v333 = vpop.f32.mrf.mxu0
    %334 = vmatprep.mubr.bf16.mxu0 0
    %335 = vmatmul.mubr.bf16.gmra.mxu0 %v195
    %v336 = vpop.f32.mrf.mxu0
    %v337 = vadd.f32 %v69, %v336
    %v338 = vpop.f32.mrf.mxu0
    %v339 = vpop.f32.mrf.mxu0
    %v340 = vadd.f32 %v69, %v339
    %v341 = vpop.f32.mrf.mxu0
    %342 = vmatprep.mubr.bf16.mxu0 0
    %343 = vmatmul.mubr.bf16.gmra.mxu0 %v198
    %v344 = vpop.f32.mrf.mxu0
    %v345 = vadd.f32 %v69, %v344
    %v346 = vpop.f32.mrf.mxu0
    %v347 = vpop.f32.mrf.mxu0
    %v348 = vadd.f32 %v69, %v347
    %v349 = vpop.f32.mrf.mxu0
    %350 = vmatprep.mubr.bf16.mxu0 0
    %351 = vmatmul.mubr.bf16.gmra.mxu0 %v201
    %v352 = vpop.f32.mrf.mxu0
    %v353 = vadd.f32 %v69, %v352
    %v354 = vpop.f32.mrf.mxu0
    %v355 = vpop.f32.mrf.mxu0
    %v356 = vadd.f32 %v69, %v355
    %v357 = vpop.f32.mrf.mxu0
    %358 = vmatprep.mubr.bf16.mxu0 0
    %359 = vmatmul.mubr.bf16.gmra.mxu0 %v204
    %v360 = vpop.f32.mrf.mxu0
    %v361 = vadd.f32 %v69, %v360
    %v362 = vpop.f32.mrf.mxu0
    %v363 = vpop.f32.mrf.mxu0
    %v364 = vadd.f32 %v69, %v363
    %v365 = vpop.f32.mrf.mxu0
    %366 = vdwg.mxu0
    %v367 = vmax.f32 %v241, 0.0
    %v368 = vmax.f32 %v244, 0.0
    %v369 = vmax.f32 %v249, 0.0
    %v370 = vmax.f32 %v252, 0.0
    %v371 = vmax.f32 %v257, 0.0
    %v372 = vmax.f32 %v260, 0.0
    %v373 = vmax.f32 %v265, 0.0
    %v374 = vmax.f32 %v268, 0.0
    %v375 = vmax.f32 %v273, 0.0
    %v376 = vmax.f32 %v276, 0.0
    %v377 = vmax.f32 %v281, 0.0
    %v378 = vmax.f32 %v284, 0.0
    %v379 = vmax.f32 %v289, 0.0
    %v380 = vmax.f32 %v292, 0.0
    %v381 = vmax.f32 %v297, 0.0
    %v382 = vmax.f32 %v300, 0.0
    %v383 = vmax.f32 %v305, 0.0
    %v384 = vmax.f32 %v308, 0.0
    %v385 = vmax.f32 %v313, 0.0
    %v386 = vmax.f32 %v316, 0.0
    %v387 = vmax.f32 %v321, 0.0
    %v388 = vmax.f32 %v324, 0.0
    %v389 = vmax.f32 %v329, 0.0
    %v390 = vmax.f32 %v332, 0.0
    %v391 = vmax.f32 %v337, 0.0
    %v392 = vmax.f32 %v340, 0.0
    %v393 = vmax.f32 %v345, 0.0
    %v394 = vmax.f32 %v348, 0.0
    %v395 = vmax.f32 %v353, 0.0
    %v396 = vmax.f32 %v356, 0.0
    %v397 = vmax.f32 %v361, 0.0
    %v398 = vmax.f32 %v364, 0.0
    %v399 = vpack.c.bf16 %v368, %v367
    %v400 = vpack.c.bf16 %v370, %v369
    %v401 = vpack.c.bf16 %v372, %v371
    %v402 = vpack.c.bf16 %v374, %v373
    %v403 = vpack.c.bf16 %v376, %v375
    %v404 = vpack.c.bf16 %v378, %v377
    %v405 = vpack.c.bf16 %v380, %v379
    %v406 = vpack.c.bf16 %v382, %v381
    %v407 = vpack.c.bf16 %v384, %v383
    %v408 = vpack.c.bf16 %v386, %v385
    %v409 = vpack.c.bf16 %v388, %v387
    %v410 = vpack.c.bf16 %v390, %v389
    %v411 = vpack.c.bf16 %v392, %v391
    %v412 = vpack.c.bf16 %v394, %v393
    %v413 = vpack.c.bf16 %v396, %v395
    %v414 = vpack.c.bf16 %v398, %v397
    %v431 = vunpack.c.l.b16 %v399
    %v432 = vunpack.c.h.b16 %v399
    %v433 = vunpack.c.l.b16 %v400
    %v434 = vunpack.c.h.b16 %v400
    %v435 = vunpack.c.l.b16 %v401
    %v436 = vunpack.c.h.b16 %v401
    %v437 = vunpack.c.l.b16 %v402
    %v438 = vunpack.c.h.b16 %v402
    %v439 = vunpack.c.l.b16 %v403
    %v440 = vunpack.c.h.b16 %v403
    %v441 = vunpack.c.l.b16 %v404
    %v442 = vunpack.c.h.b16 %v404
    %v443 = vunpack.c.l.b16 %v405
    %v444 = vunpack.c.h.b16 %v405
    %v445 = vunpack.c.l.b16 %v406
    %v446 = vunpack.c.h.b16 %v406
    %v447 = vunpack.c.l.b16 %v407
    %v448 = vunpack.c.h.b16 %v407
    %v449 = vunpack.c.l.b16 %v408
    %v450 = vunpack.c.h.b16 %v408
    %v451 = vunpack.c.l.b16 %v409
    %v452 = vunpack.c.h.b16 %v409
    %v453 = vunpack.c.l.b16 %v410
    %v454 = vunpack.c.h.b16 %v410
    %v455 = vunpack.c.l.b16 %v411
    %v456 = vunpack.c.h.b16 %v411
    %v457 = vunpack.c.l.b16 %v412
    %v458 = vunpack.c.h.b16 %v412
    %v459 = vunpack.c.l.b16 %v413
    %v460 = vunpack.c.h.b16 %v413
    %v461 = vunpack.c.l.b16 %v414
    %v462 = vunpack.c.h.b16 %v414
    %v463 = vpack.c.b16 %v431, %v431
    %v464 = vpack.c.b16 %v432, %v432
    %v465 = vpack.c.b16 %v433, %v433
    %v466 = vpack.c.b16 %v434, %v434
    %v467 = vpack.c.b16 %v435, %v435
    %v468 = vpack.c.b16 %v436, %v436
    %v469 = vpack.c.b16 %v437, %v437
    %v470 = vpack.c.b16 %v438, %v438
    %v471 = vpack.c.b16 %v439, %v439
    %v472 = vpack.c.b16 %v440, %v440
    %v473 = vpack.c.b16 %v441, %v441
    %v474 = vpack.c.b16 %v442, %v442
    %v475 = vpack.c.b16 %v443, %v443
    %v476 = vpack.c.b16 %v444, %v444
    %v477 = vpack.c.b16 %v445, %v445
    %v478 = vpack.c.b16 %v446, %v446
    %v479 = vpack.c.b16 %v447, %v447
    %v480 = vpack.c.b16 %v448, %v448
    %v481 = vpack.c.b16 %v449, %v449
    %v482 = vpack.c.b16 %v450, %v450
    %v483 = vpack.c.b16 %v451, %v451
    %v484 = vpack.c.b16 %v452, %v452
    %v485 = vpack.c.b16 %v453, %v453
    %v486 = vpack.c.b16 %v454, %v454
    %v487 = vpack.c.b16 %v455, %v455
    %v488 = vpack.c.b16 %v456, %v456
    %v489 = vpack.c.b16 %v457, %v457
    %v490 = vpack.c.b16 %v458, %v458
    %v491 = vpack.c.b16 %v459, %v459
    %v492 = vpack.c.b16 %v460, %v460
    %v493 = vpack.c.b16 %v461, %v461
    %v494 = vpack.c.b16 %v462, %v462
    %vm527 = vcmask 257024
    %528 = vst.msk [vmem:[%s7] sm:$0xf] %vm527, %v463
    %529 = vst.msk [vmem:[%s7 + $0x4] sm:$0xf] %vm527, %v464
    %530 = vst.msk [vmem:[%s7 + $0x8] sm:$0xf] %vm527, %v465
    %531 = vst.msk [vmem:[%s7 + $0xc] sm:$0xf] %vm527, %v466
    %532 = vst.msk [vmem:[%s7 + $0x10] sm:$0xf] %vm527, %v467
    %533 = vst.msk [vmem:[%s7 + $0x14] sm:$0xf] %vm527, %v468
    %534 = vst.msk [vmem:[%s7 + $0x18] sm:$0xf] %vm527, %v469
    %535 = vst.msk [vmem:[%s7 + $0x1c] sm:$0xf] %vm527, %v470
    %536 = vst.msk [vmem:[%s7 + $0x20] sm:$0xf] %vm527, %v471
    %537 = vst.msk [vmem:[%s7 + $0x24] sm:$0xf] %vm527, %v472
    %538 = vst.msk [vmem:[%s7 + $0x28] sm:$0xf] %vm527, %v473
    %539 = vst.msk [vmem:[%s7 + $0x2c] sm:$0xf] %vm527, %v474
    %540 = vst.msk [vmem:[%s7 + $0x30] sm:$0xf] %vm527, %v475
    %541 = vst.msk [vmem:[%s7 + $0x34] sm:$0xf] %vm527, %v476
    %542 = vst.msk [vmem:[%s7 + $0x38] sm:$0xf] %vm527, %v477
    %543 = vst.msk [vmem:[%s7 + $0x3c] sm:$0xf] %vm527, %v478
    %544 = vst.msk [vmem:[%s7 + $0x40] sm:$0xf] %vm527, %v479
    %545 = vst.msk [vmem:[%s7 + $0x44] sm:$0xf] %vm527, %v480
    %546 = vst.msk [vmem:[%s7 + $0x48] sm:$0xf] %vm527, %v481
    %547 = vst.msk [vmem:[%s7 + $0x4c] sm:$0xf] %vm527, %v482
    %548 = vst.msk [vmem:[%s7 + $0x50] sm:$0xf] %vm527, %v483
    %549 = vst.msk [vmem:[%s7 + $0x54] sm:$0xf] %vm527, %v484
    %550 = vst.msk [vmem:[%s7 + $0x58] sm:$0xf] %vm527, %v485
    %551 = vst.msk [vmem:[%s7 + $0x5c] sm:$0xf] %vm527, %v486
    %552 = vst.msk [vmem:[%s7 + $0x60] sm:$0xf] %vm527, %v487
    %553 = vst.msk [vmem:[%s7 + $0x64] sm:$0xf] %vm527, %v488
    %554 = vst.msk [vmem:[%s7 + $0x68] sm:$0xf] %vm527, %v489
    %555 = vst.msk [vmem:[%s7 + $0x6c] sm:$0xf] %vm527, %v490
    %556 = vst.msk [vmem:[%s7 + $0x70] sm:$0xf] %vm527, %v491
    %557 = vst.msk [vmem:[%s7 + $0x74] sm:$0xf] %vm527, %v492
    %558 = vst.msk [vmem:[%s7 + $0x78] sm:$0xf] %vm527, %v493
    %559 = vst.msk [vmem:[%s7 + $0x7c] sm:$0xf] %vm527, %v494
    %v560 = vld [vmem:[%s3] sm:$0xf]
    %v561 = vld [vmem:[%s3 + $0x4] sm:$0xf]
    %v562 = vld [vmem:[%s3 + $0x8] sm:$0xf]
    %v563 = vld [vmem:[%s3 + $0xc] sm:$0xf]
    %v564 = vld [vmem:[%s3 + $0x10] sm:$0xf]
    %v565 = vld [vmem:[%s3 + $0x14] sm:$0xf]
    %v566 = vld [vmem:[%s3 + $0x18] sm:$0xf]
    %v567 = vld [vmem:[%s3 + $0x1c] sm:$0xf]
    %v568 = vld [vmem:[%s3 + $0x20] sm:$0xf]
    %v569 = vld [vmem:[%s3 + $0x24] sm:$0xf]
    %v570 = vld [vmem:[%s3 + $0x28] sm:$0xf]
    %v571 = vld [vmem:[%s3 + $0x2c] sm:$0xf]
    %v572 = vld [vmem:[%s3 + $0x30] sm:$0xf]
    %v573 = vld [vmem:[%s3 + $0x34] sm:$0xf]
    %v574 = vld [vmem:[%s3 + $0x38] sm:$0xf]
    %v575 = vld [vmem:[%s3 + $0x3c] sm:$0xf]
    %v576 = vld [vmem:[%s3 + $0x40] sm:$0xf]
    %v577 = vld [vmem:[%s3 + $0x44] sm:$0xf]
    %v578 = vld [vmem:[%s3 + $0x48] sm:$0xf]
    %v579 = vld [vmem:[%s3 + $0x4c] sm:$0xf]
    %v580 = vld [vmem:[%s3 + $0x50] sm:$0xf]
    %v581 = vld [vmem:[%s3 + $0x54] sm:$0xf]
    %v582 = vld [vmem:[%s3 + $0x58] sm:$0xf]
    %v583 = vld [vmem:[%s3 + $0x5c] sm:$0xf]
    %v584 = vld [vmem:[%s3 + $0x60] sm:$0xf]
    %v585 = vld [vmem:[%s3 + $0x64] sm:$0xf]
    %v586 = vld [vmem:[%s3 + $0x68] sm:$0xf]
    %v587 = vld [vmem:[%s3 + $0x6c] sm:$0xf]
    %v588 = vld [vmem:[%s3 + $0x70] sm:$0xf]
    %v589 = vld [vmem:[%s3 + $0x74] sm:$0xf]
    %v590 = vld [vmem:[%s3 + $0x78] sm:$0xf]
    %v591 = vld [vmem:[%s3 + $0x7c] sm:$0xf]
    %v592 = vld [vmem:[%s4] sm:$0x1]
    %v594 = vlaneseq
    %v595 = vshrl.u32 %v594, 7
    %v596 = vsub.s32 0, %v595
    %v597 = vrot.slane %v592, %v596
    %615 = vxpose.xlu0.c.b16.start [1/8] %v135, 128
    %616 = vxpose.xlu0.c.b16.cont [2/8] %v136, 128
    %617 = vxpose.xlu0.c.b16.cont [3/8] %v137, 128
    %618 = vxpose.xlu0.c.b16.cont [4/8] %v138, 128
    %619 = vxpose.xlu0.c.b16.cont [5/8] %v139, 128
    %620 = vxpose.xlu0.c.b16.cont [6/8] %v140, 128
    %621 = vxpose.xlu0.c.b16.cont [7/8] %v141, 128
    %622 = vxpose.xlu0.c.b16.end [8/8] %v142, 128
    %v623 = vpop.trf.xlu0
    %v624 = vpop.trf.xlu0
    %v625 = vpop.trf.xlu0
    %v626 = vpop.trf.xlu0
    %v627 = vpop.trf.xlu0
    %v628 = vpop.trf.xlu0
    %v629 = vpop.trf.xlu0
    %v630 = vpop.trf.xlu0
    %631 = vxpose.xlu0.c.b16.start [1/8] %v143, 128
    %632 = vxpose.xlu0.c.b16.cont [2/8] %v144, 128
    %633 = vxpose.xlu0.c.b16.cont [3/8] %v145, 128
    %634 = vxpose.xlu0.c.b16.cont [4/8] %v146, 128
    %635 = vxpose.xlu0.c.b16.cont [5/8] %v147, 128
    %636 = vxpose.xlu0.c.b16.cont [6/8] %v148, 128
    %637 = vxpose.xlu0.c.b16.cont [7/8] %v149, 128
    %638 = vxpose.xlu0.c.b16.end [8/8] %v150, 128
    %v639 = vpop.trf.xlu0
    %v640 = vpop.trf.xlu0
    %v641 = vpop.trf.xlu0
    %v642 = vpop.trf.xlu0
    %v643 = vpop.trf.xlu0
    %v644 = vpop.trf.xlu0
    %v645 = vpop.trf.xlu0
    %v646 = vpop.trf.xlu0
    %v679 = vunpack.c.l.b16 %v560
    %v680 = vunpack.c.l.b16 %v561
    %v681 = vunpack.c.l.b16 %v562
    %v682 = vunpack.c.l.b16 %v563
    %v683 = vunpack.c.l.b16 %v564
    %v684 = vunpack.c.l.b16 %v565
    %v685 = vunpack.c.l.b16 %v566
    %v686 = vunpack.c.l.b16 %v567
    %v687 = vunpack.c.l.b16 %v568
    %v688 = vunpack.c.l.b16 %v569
    %v689 = vunpack.c.l.b16 %v570
    %v690 = vunpack.c.l.b16 %v571
    %v691 = vunpack.c.l.b16 %v572
    %v692 = vunpack.c.l.b16 %v573
    %v693 = vunpack.c.l.b16 %v574
    %v694 = vunpack.c.l.b16 %v575
    %v695 = vunpack.c.l.b16 %v576
    %v696 = vunpack.c.l.b16 %v577
    %v697 = vunpack.c.l.b16 %v578
    %v698 = vunpack.c.l.b16 %v579
    %v699 = vunpack.c.l.b16 %v580
    %v700 = vunpack.c.l.b16 %v581
    %v701 = vunpack.c.l.b16 %v582
    %v702 = vunpack.c.l.b16 %v583
    %v703 = vunpack.c.l.b16 %v584
    %v704 = vunpack.c.l.b16 %v585
    %v705 = vunpack.c.l.b16 %v586
    %v706 = vunpack.c.l.b16 %v587
    %v707 = vunpack.c.l.b16 %v588
    %v708 = vunpack.c.l.b16 %v589
    %v709 = vunpack.c.l.b16 %v590
    %v710 = vunpack.c.l.b16 %v591
    %v711 = vpack.c.b16 %v680, %v679
    %v712 = vpack.c.b16 %v682, %v681
    %v713 = vpack.c.b16 %v684, %v683
    %v714 = vpack.c.b16 %v686, %v685
    %v715 = vpack.c.b16 %v688, %v687
    %v716 = vpack.c.b16 %v690, %v689
    %v717 = vpack.c.b16 %v692, %v691
    %v718 = vpack.c.b16 %v694, %v693
    %v719 = vpack.c.b16 %v696, %v695
    %v720 = vpack.c.b16 %v698, %v697
    %v721 = vpack.c.b16 %v700, %v699
    %v722 = vpack.c.b16 %v702, %v701
    %v723 = vpack.c.b16 %v704, %v703
    %v724 = vpack.c.b16 %v706, %v705
    %v725 = vpack.c.b16 %v708, %v707
    %v726 = vpack.c.b16 %v710, %v709
    %743 = vmatprep.subr.bf16.mxu0 0
    %744 = vmatpush1.bf16.msra.mxu0 %v718
    %745 = vmatprep.subr.bf16.mxu0 0
    %746 = vmatpush1.bf16.msra.mxu0 %v717
    %747 = vmatprep.subr.bf16.mxu0 0
    %748 = vmatpush1.bf16.msra.mxu0 %v716
    %749 = vmatprep.subr.bf16.mxu0 0
    %750 = vmatpush1.bf16.msra.mxu0 %v715
    %751 = vmatprep.subr.bf16.mxu0 0
    %752 = vmatpush1.bf16.msra.mxu0 %v714
    %753 = vmatprep.subr.bf16.mxu0 0
    %754 = vmatpush1.bf16.msra.mxu0 %v713
    %755 = vmatprep.subr.bf16.mxu0 0
    %756 = vmatpush1.bf16.msra.mxu0 %v712
    %757 = vmatprep.subr.bf16.mxu0 0
    %758 = vmatpush1.bf16.msra.mxu0 %v711
    %759 = vmatprep.subr.bf16.mxu0 0
    %760 = vmatpush2.bf16.msra.mxu0 %v726
    %761 = vmatprep.subr.bf16.mxu0 0
    %762 = vmatpush2.bf16.msra.mxu0 %v725
    %763 = vmatprep.subr.bf16.mxu0 0
    %764 = vmatpush2.bf16.msra.mxu0 %v724
    %765 = vmatprep.subr.bf16.mxu0 0
    %766 = vmatpush2.bf16.msra.mxu0 %v723
    %767 = vmatprep.subr.bf16.mxu0 0
    %768 = vmatpush2.bf16.msra.mxu0 %v722
    %769 = vmatprep.subr.bf16.mxu0 0
    %770 = vmatpush2.bf16.msra.mxu0 %v721
    %771 = vmatprep.subr.bf16.mxu0 0
    %772 = vmatpush2.bf16.msra.mxu0 %v720
    %773 = vmatprep.subr.bf16.mxu0 0
    %774 = vmatpush2.bf16.msra.mxu0 %v719
    %775 = vmatprep.mubr.bf16.mxu0 %v639
    %776 = vmatmul.mubr.bf16.gmra.mxu0 %v623
    %v777 = vpop.f32.mrf.mxu0
    %v778 = vadd.f32 %v597, %v777
    %v779 = vpop.f32.mrf.mxu0
    %v780 = vpop.f32.mrf.mxu0
    %v781 = vadd.f32 %v597, %v780
    %v782 = vpop.f32.mrf.mxu0
    %783 = vdwg.mxu0
    %v784 = vmax.f32 %v778, 0.0
    %v785 = vmax.f32 %v781, 0.0
    %v786 = vpack.c.bf16 %v785, %v784
    %v787 = vld [vmem:[%s5] sm:$0xf]
    %v788 = vld [vmem:[%s5 + $0x4] sm:$0xf]
    %v789 = vld [vmem:[%s5 + $0x8] sm:$0xf]
    %v790 = vld [vmem:[%s5 + $0xc] sm:$0xf]
    %v791 = vld [vmem:[%s6] sm:$0x1]
    %v793 = vlaneseq
    %v794 = vshrl.u32 %v793, 7
    %v795 = vsub.s32 0, %v794
    %v796 = vrot.slane %v791, %v795
    %v802 = vunpack.c.l.b16 %v787
    %v803 = vunpack.c.l.b16 %v788
    %v804 = vunpack.c.l.b16 %v789
    %v805 = vunpack.c.l.b16 %v790
    %v806 = vpack.c.b16 %v803, %v802
    %v807 = vpack.c.b16 %v805, %v804
    %vm810 = vcmask 261120
    %v812 = vsel %vm810, %v786, 0
    %814 = vmatprep.subr.bf16.mxu0 0
    %815 = vmatpush1.bf16.msra.mxu0 0
    %816 = vmatprep.subr.bf16.mxu0 0
    %817 = vmatpush1.bf16.msra.mxu0 0
    %818 = vmatprep.subr.bf16.mxu0 0
    %819 = vmatpush1.bf16.msra.mxu0 0
    %820 = vmatprep.subr.bf16.mxu0 0
    %821 = vmatpush1.bf16.msra.mxu0 0
    %822 = vmatprep.subr.bf16.mxu0 0
    %823 = vmatpush1.bf16.msra.mxu0 0
    %824 = vmatprep.subr.bf16.mxu0 0
    %825 = vmatpush1.bf16.msra.mxu0 0
    %826 = vmatprep.subr.bf16.mxu0 0
    %827 = vmatpush1.bf16.msra.mxu0 %v807
    %828 = vmatprep.subr.bf16.mxu0 0
    %829 = vmatpush1.bf16.msra.mxu0 %v806
    %830 = vmatprep.subr.bf16.mxu0 0
    %831 = vmatpush2.bf16.msra.mxu0 0
    %832 = vmatprep.subr.bf16.mxu0 0
    %833 = vmatpush2.bf16.msra.mxu0 0
    %834 = vmatprep.subr.bf16.mxu0 0
    %835 = vmatpush2.bf16.msra.mxu0 0
    %836 = vmatprep.subr.bf16.mxu0 0
    %837 = vmatpush2.bf16.msra.mxu0 0
    %838 = vmatprep.subr.bf16.mxu0 0
    %839 = vmatpush2.bf16.msra.mxu0 0
    %840 = vmatprep.subr.bf16.mxu0 0
    %841 = vmatpush2.bf16.msra.mxu0 0
    %842 = vmatprep.subr.bf16.mxu0 0
    %843 = vmatpush2.bf16.msra.mxu0 0
    %844 = vmatprep.subr.bf16.mxu0 0
    %845 = vmatpush2.bf16.msra.mxu0 0
    %846 = vmatprep.mubr.bf16.mxu0 0
    %847 = vmatmul.mubr.bf16.gmra.mxu0 %v812
    %v848 = vpop.f32.mrf.mxu0
    %v849 = vadd.f32 %v796, %v848
    %v850 = vpop.f32.mrf.mxu0
    %v851 = vpop.f32.mrf.mxu0
    %v852 = vadd.f32 %v796, %v851
    %v853 = vpop.f32.mrf.mxu0
    %854 = vdwg.mxu0
    %v855 = vpack.c.bf16 %v852, %v849
    %v857 = vunpack.c.l.b16 %v855
    %v858 = vunpack.c.h.b16 %v855
    %v859 = vpack.c.b16 %v857, %v857
    %v860 = vpack.c.b16 %v858, %v858
    %vm863 = vcmask 125952
    %864 = vst.msk [vmem:[#allocation2] sm:$0xf] %vm863, %v859
    %865 = vst.msk [vmem:[#allocation2 + $0x4] sm:$0xf] %vm863, %v860
    // Predicated region
    $region30: #{tpu_custom_call.1} parent=1 // pred_check
      _
    $region31: #{tpu_custom_call.1} parent=1 // pred_check_branch
      %867 = sbr.rel (0) target = $region33
    $region32: #{tpu_custom_call.1} parent=1 // pred_region
      _
    $region33: #{tpu_custom_call.1} parent=1 // pred_fallthru
      _
    // Predicated region
    $region34: #{tpu_custom_call.1} parent=1 // pred_check
      _
    $region35: #{tpu_custom_call.1} parent=1 // pred_check_branch
      %869 = sbr.rel (0) target = $region37
    $region36: #{tpu_custom_call.1} parent=1 // pred_region
      %s871 = ssub.s32 128, 128
      %872 = vsyncadd [#allocation3], %s871
      %s873 = sshll.u32 [#allocation2], 4
      %s874 = int_to_ptr.vmem [resolvable:$true] %s873
      %879 = dma.vmem_to_hbm [thread:$0]  %s874, 128, %s8, [#allocation3], 64, 64, 4
    $region37: #{tpu_custom_call.1} parent=1 // pred_fallthru
      _
    // Predicated region
    $region38: #{tpu_custom_call.1} parent=1 // pred_check
      _
    $region39: #{tpu_custom_call.1} parent=1 // pred_check_branch
      %881 = sbr.rel (0) target = $region41
    $region40: #{tpu_custom_call.1} parent=1 // pred_region
      _
    $region41: #{tpu_custom_call.1} parent=1 // pred_fallthru
      _
    // Predicated region
    $region42: #{tpu_custom_call.1} parent=1 // pred_check
      _
    $region43: #{tpu_custom_call.1} parent=1 // pred_check_branch
      %883 = sbr.rel (0) target = $region45
    $region44: #{tpu_custom_call.1} parent=1 // pred_region
      %884 = dma.done [#allocation3], 128
    $region45: #{tpu_custom_call.1} parent=1 // pred_fallthru
      _
    %885 = vsyncpa [#allocation3], 1

</llo_original>
